<compile_context>
chip_gen: v6e
topology: v6e:2x2x1
jax: 0.10.0
libtpu: 0.0.40
codegen_flags: <defaults>
</compile_context>

<pallas_src>
import numpy as np

import jax
import jax.numpy as jnp
from jax import lax
from jax.experimental import pallas as pl
from jax.experimental.pallas import tpu as pltpu


def _round_up(x, m):
    return ((x + m - 1) // m) * m


def _make_mlp_kernel(num_layers):
    """Kernel body. refs = (x, w0, b0, ..., w{L-1}, b{L-1}, out).

    x:      (block_m, d_in)   float32   (native layout, no wrapper transpose)
    w_j:    (out_j, in_j)     bfloat16  for j < L-1 (PyTorch Linear layout)
    b_j:    (out_j, 1)        float32
    w_{L-1}:(in, 1)           float32   (pre-transposed; VPU/XLU path)
    b_{L-1}:(1, 1)            float32
    out:    (1, block_m)      float32   (lane-dense)
    """

    def kernel(*refs):
        x_ref = refs[0]
        o_ref = refs[-1]
        p = refs[1:-1]

        # --- Layer 0: contract x's feature axis directly ("A @ B.T" MXU form);
        # result lands in the transposed (features, batch) layout.
        w0 = p[0][...]                                   # (hidden, d_in) bf16
        b0 = p[1][...]                                   # (hidden, 1)    f32
        xb = x_ref[...].astype(jnp.bfloat16)             # (block_m, d_in)
        acc = lax.dot_general(
            w0, xb,
            dimension_numbers=(((1,), (1,)), ((), ())),
            preferred_element_type=jnp.float32,
        ) + b0                                           # (hidden, block_m) f32
        # F.dropout with the module default p=0.0 is the identity.
        # TODO(synk): dropout > 0 in training mode would need pltpu PRNG masks.
        h = jnp.maximum(acc, 0.0)                        # ReLU (f32)
        if num_layers > 2:
            h = h.astype(jnp.bfloat16)                   # next layer is MXU

        # --- Hidden layers 1..L-2 on the MXU (bf16 operands, f32 accumulation).
        for j in range(1, num_layers - 1):
            w = p[2 * j][...]                            # (hidden, hidden) bf16
            b = p[2 * j + 1][...]                        # (hidden, 1)      f32
            acc = jnp.dot(w, h, preferred_element_type=jnp.float32) + b
            h = jnp.maximum(acc, 0.0)
            if j < num_layers - 2:
                h = h.astype(jnp.bfloat16)               # feeds another MXU layer
            # else: keep f32 — it feeds the VPU/XLU final layer below.

        # --- Final out_dim==1 layer: VPU multiply + sublane (XLU) reduce instead
        # of an M=1 MXU pass; full f32 for the last contraction.
        w_last = p[2 * (num_layers - 1)][...]            # (hidden, 1) f32
        b_last = p[2 * (num_layers - 1) + 1][...]        # (1, 1)      f32
        out = jnp.sum(h * w_last, axis=0, keepdims=True) + b_last   # (1, block_m)
        o_ref[...] = out.astype(o_ref.dtype)

    return kernel


def prepare_params(params):
    """One-time conversion of PyTorch-layout (W (out,in), b (out,)) params to
    the kernel layout (bf16 weights, (out,1) biases; final layer (in,1) f32)."""
    num_layers = len(params)
    assert num_layers > 1
    assert params[-1][0].shape[0] == 1, "module's final layer has out_features=1"
    prepared = []
    for j, (w, b) in enumerate(params):
        if j < num_layers - 1:
            wk = jnp.asarray(w, jnp.float32).astype(jnp.bfloat16)      # (out, in)
        else:
            wk = jnp.asarray(w, jnp.float32).T                          # (in, 1)
        bk = jnp.asarray(b, jnp.float32).reshape(-1, 1)                 # (out, 1)
        prepared.append((wk, bk))
    return prepared


def feedforward_nn(x, prepared_params, *, block_m=1024, interpret=False):
    """x: (N, input_size) float32. prepared_params: output of prepare_params()."""
    n, d_in = x.shape
    num_layers = len(prepared_params)

    # block_m: multiple of 256 (full v6e/v7x MXU N tiles).  Cap so there are at
    # least 2 batch tiles whenever the batch allows it, so v7x can shard the
    # "parallel" batch axis across its 2 TensorCores.
    block_m = max(256, _round_up(block_m, 256))
    if n > 256:
        block_m = min(block_m, _round_up(pl.cdiv(n, 2), 256))
    else:
        block_m = 256
    grid = (pl.cdiv(n, block_m),)

    flat_args = [x.astype(jnp.float32)]
    in_specs = [pl.BlockSpec((block_m, d_in), lambda i: (i, 0))]
    for (w, b) in prepared_params:
        flat_args += [w, b]
        in_specs += [pl.BlockSpec(w.shape, lambda i: (0, 0)),
                     pl.BlockSpec(b.shape, lambda i: (0, 0))]

    out_t = pl.pallas_call(
        _make_mlp_kernel(num_layers),
        out_shape=jax.ShapeDtypeStruct((1, n), jnp.float32),
        grid=grid,
        in_specs=in_specs,
        out_specs=pl.BlockSpec((1, block_m), lambda i: (0, i)),
        compiler_params=pltpu.CompilerParams(
            dimension_semantics=("parallel",),     # batch tiles -> both TCs on v7x
        ),
        interpret=interpret,
    )(*flat_args)

    out = out_t.reshape(n, 1)                       # (1, N) -> (N, 1): layout-only
    # PyTorch forward casts float32 -> float64 at the end.  TPUs have no native
    # f64; only apply the cast if x64 is enabled (otherwise it stays float32).
    # TODO(synk): exact float64 output requires jax_enable_x64 + an f64 backend.
    if jax.config.jax_enable_x64:
        out = out.astype(jnp.float64)
    return out


def init_params(key, input_size, num_layers=3, hidden_size=128, std=0.1):
    """Matches the module init: normal(std) weights, zero biases, (out, in) layout."""
    assert num_layers > 1
    params = []
    for j in range(num_layers):
        in_dim = input_size if j == 0 else hidden_size
        out_dim = hidden_size if j < num_layers - 1 else 1
        key, wk = jax.random.split(key)
        w = std * jax.random.normal(wk, (out_dim, in_dim), dtype=jnp.float32)
        b = jnp.zeros((out_dim,), dtype=jnp.float32)
        params.append((w, b))
    return params


def _reference_match(x, params):
    """Mirrors the kernel numerics: bf16 MXU layers with f32 accum, f32 last layer."""
    h = x.astype(jnp.float32)
    n = len(params)
    for j, (w, b) in enumerate(params):
        if j < n - 1:
            h = jnp.dot(h.astype(jnp.bfloat16), w.astype(jnp.bfloat16).T,
                        preferred_element_type=jnp.float32) + b
            h = jnp.maximum(h, 0.0)
        else:
            h = jnp.sum(h * w[0][None, :], axis=1, keepdims=True) + b
    return h


def _reference_f32(x, params):
    """Full-precision (numpy) reference of the PyTorch forward (pre-double-cast)."""
    h = np.asarray(x, np.float32)
    n = len(params)
    for j, (w, b) in enumerate(params):
        h = h @ np.asarray(w, np.float32).T + np.asarray(b, np.float32)
        if j < n - 1:
            h = np.maximum(h, 0.0)
    return h


if __name__ == "__main__":
    key = jax.random.PRNGKey(0)
    batch, input_size, hidden_size, num_layers = 512, 16, 128, 3

    key, xk = jax.random.split(key)
    x = jax.random.normal(xk, (batch, input_size), dtype=jnp.float32)

    params = init_params(key, input_size, num_layers=num_layers,
                         hidden_size=hidden_size, std=0.1)
    kparams = prepare_params(params)            # one-time bf16 / (out,1) conversion

    out = feedforward_nn(x, kparams)            # block_m=1024 -> capped to 256, grid=(2,)
    out = jax.block_until_ready(out)

    assert out.shape == (batch, 1), out.shape
    out_f32 = np.asarray(out, np.float32)

    ref_match = np.asarray(_reference_match(x, params), np.float32)
    ref_f32 = _reference_f32(np.asarray(x), params)
    assert np.allclose(out_f32, ref_match, atol=5e-3, rtol=5e-3), (
        float(np.max(np.abs(out_f32 - ref_match))))
    assert np.allclose(out_f32, ref_f32, atol=5e-2, rtol=5e-2), (
        float(np.max(np.abs(out_f32 - ref_f32))))

    print("KERNEL_OK")
</pallas_src>

<mosaic_0001>
module attributes {stable_mosaic.version = 11 : i64} {
  func.func @kernel(%arg0: i32, %arg1: memref<256x16xf32, #tpu.memory_space<vmem>>, %arg2: memref<128x16xbf16, #tpu.memory_space<vmem>>, %arg3: memref<128x1xf32, #tpu.memory_space<vmem>>, %arg4: memref<128x128xbf16, #tpu.memory_space<vmem>>, %arg5: memref<128x1xf32, #tpu.memory_space<vmem>>, %arg6: memref<128x1xf32, #tpu.memory_space<vmem>>, %arg7: memref<1x1xf32, #tpu.memory_space<vmem>>, %arg8: memref<1x256xf32, #tpu.memory_space<vmem>>) attributes {dimension_semantics = [#tpu.dimension_semantics<parallel>], iteration_bounds = array<i64: 2>, scalar_prefetch = 0 : i64, scratch_operands = 0 : i64, tpu.core_type = #tpu.core_type<tc>, window_params = [{transform_indices = @transform_0, window_bounds = array<i64: 256, 16>}, {pipeline_mode = #tpu.pipeline_mode<synchronous>, transform_indices = @transform_1, window_bounds = array<i64: 128, 16>}, {pipeline_mode = #tpu.pipeline_mode<synchronous>, transform_indices = @transform_2, window_bounds = array<i64: 128, 1>}, {pipeline_mode = #tpu.pipeline_mode<synchronous>, transform_indices = @transform_3, window_bounds = array<i64: 128, 128>}, {pipeline_mode = #tpu.pipeline_mode<synchronous>, transform_indices = @transform_4, window_bounds = array<i64: 128, 1>}, {pipeline_mode = #tpu.pipeline_mode<synchronous>, transform_indices = @transform_5, window_bounds = array<i64: 128, 1>}, {pipeline_mode = #tpu.pipeline_mode<synchronous>, transform_indices = @transform_6, window_bounds = array<i64: 1, 1>}, {transform_indices = @transform_7, window_bounds = array<i64: 1, 256>}]} {
    %c0 = arith.constant 0 : index
    %c0_0 = arith.constant 0 : index
    %0 = vector.load %arg2[%c0, %c0_0] : memref<128x16xbf16, #tpu.memory_space<vmem>>, vector<128x16xbf16>
    %c0_1 = arith.constant 0 : index
    %c0_2 = arith.constant 0 : index
    %1 = vector.load %arg3[%c0_1, %c0_2] : memref<128x1xf32, #tpu.memory_space<vmem>>, vector<128x1xf32>
    %c0_3 = arith.constant 0 : index
    %c0_4 = arith.constant 0 : index
    %2 = vector.load %arg1[%c0_3, %c0_4] : memref<256x16xf32, #tpu.memory_space<vmem>>, vector<256x16xf32>
    %3 = arith.truncf %2 : vector<256x16xf32> to vector<256x16xbf16>
    %cst = arith.constant dense<0.000000e+00> : vector<128x256xf32>
    %4 = tpu.matmul %0, %3, %cst {dimension_numbers = #tpu.dot_dimension_numbers<[1], [1], [0], [0], [0, 0, 1, 0], [], []>} : vector<128x16xbf16>, vector<256x16xbf16>, vector<128x256xf32> -> vector<128x256xf32>
    %5 = vector.broadcast %1 : vector<128x1xf32> to vector<128x256xf32>
    %6 = arith.addf %4, %5 : vector<128x256xf32>
    %cst_5 = arith.constant 0.000000e+00 : f32
    %7 = vector.broadcast %cst_5 : f32 to vector<128x256xf32>
    %8 = arith.maximumf %6, %7 : vector<128x256xf32>
    %9 = arith.truncf %8 : vector<128x256xf32> to vector<128x256xbf16>
    %c0_6 = arith.constant 0 : index
    %c0_7 = arith.constant 0 : index
    %10 = vector.load %arg4[%c0_6, %c0_7] : memref<128x128xbf16, #tpu.memory_space<vmem>>, vector<128x128xbf16>
    %c0_8 = arith.constant 0 : index
    %c0_9 = arith.constant 0 : index
    %11 = vector.load %arg5[%c0_8, %c0_9] : memref<128x1xf32, #tpu.memory_space<vmem>>, vector<128x1xf32>
    %cst_10 = arith.constant dense<0.000000e+00> : vector<128x256xf32>
    %12 = tpu.matmul %10, %9, %cst_10 {dimension_numbers = #tpu.dot_dimension_numbers<[1], [0], [0], [1], [0, 0, 1, 1], [], []>} : vector<128x128xbf16>, vector<128x256xbf16>, vector<128x256xf32> -> vector<128x256xf32>
    %13 = vector.broadcast %11 : vector<128x1xf32> to vector<128x256xf32>
    %14 = arith.addf %12, %13 : vector<128x256xf32>
    %cst_11 = arith.constant 0.000000e+00 : f32
    %15 = vector.broadcast %cst_11 : f32 to vector<128x256xf32>
    %16 = arith.maximumf %14, %15 : vector<128x256xf32>
    %c0_12 = arith.constant 0 : index
    %c0_13 = arith.constant 0 : index
    %17 = vector.load %arg6[%c0_12, %c0_13] : memref<128x1xf32, #tpu.memory_space<vmem>>, vector<128x1xf32>
    %c0_14 = arith.constant 0 : index
    %c0_15 = arith.constant 0 : index
    %18 = vector.load %arg7[%c0_14, %c0_15] : memref<1x1xf32, #tpu.memory_space<vmem>>, vector<1x1xf32>
    %19 = vector.broadcast %17 : vector<128x1xf32> to vector<128x256xf32>
    %20 = arith.mulf %16, %19 : vector<128x256xf32>
    %cst_16 = arith.constant dense<0.000000e+00> : vector<256xf32>
    %21 = vector.multi_reduction <add>, %20, %cst_16 [0] : vector<128x256xf32> to vector<256xf32>
    %22 = vector.shape_cast %21 : vector<256xf32> to vector<1x256xf32>
    %23 = vector.broadcast %18 : vector<1x1xf32> to vector<1x256xf32>
    %24 = arith.addf %22, %23 : vector<1x256xf32>
    %c0_17 = arith.constant 0 : index
    %c0_18 = arith.constant 0 : index
    %25 = vector.load %arg8[%c0_17, %c0_18] : memref<1x256xf32, #tpu.memory_space<vmem>>, vector<1x256xf32>
    tpu.vector_store %arg8[%c0_17, %c0_18], %24 {strides = array<i32>} : memref<1x256xf32, #tpu.memory_space<vmem>>, vector<1x256xf32>,
    return
  }
  func.func @transform_0(%arg0: i32) -> (i32, i32) {
    %c0_i32 = arith.constant 0 : i32
    %c0_i32_0 = arith.constant 0 : i32
    return %arg0, %c0_i32 : i32, i32
  }
  func.func @transform_1(%arg0: i32) -> (i32, i32) {
    %c0_i32 = arith.constant 0 : i32
    %c0_i32_0 = arith.constant 0 : i32
    %c0_i32_1 = arith.constant 0 : i32
    return %c0_i32, %c0_i32_0 : i32, i32
  }
  func.func @transform_2(%arg0: i32) -> (i32, i32) {
    %c0_i32 = arith.constant 0 : i32
    %c0_i32_0 = arith.constant 0 : i32
    %c0_i32_1 = arith.constant 0 : i32
    return %c0_i32, %c0_i32_0 : i32, i32
  }
  func.func @transform_3(%arg0: i32) -> (i32, i32) {
    %c0_i32 = arith.constant 0 : i32
    %c0_i32_0 = arith.constant 0 : i32
    %c0_i32_1 = arith.constant 0 : i32
    return %c0_i32, %c0_i32_0 : i32, i32
  }
  func.func @transform_4(%arg0: i32) -> (i32, i32) {
    %c0_i32 = arith.constant 0 : i32
    %c0_i32_0 = arith.constant 0 : i32
    %c0_i32_1 = arith.constant 0 : i32
    return %c0_i32, %c0_i32_0 : i32, i32
  }
  func.func @transform_5(%arg0: i32) -> (i32, i32) {
    %c0_i32 = arith.constant 0 : i32
    %c0_i32_0 = arith.constant 0 : i32
    %c0_i32_1 = arith.constant 0 : i32
    return %c0_i32, %c0_i32_0 : i32, i32
  }
  func.func @transform_6(%arg0: i32) -> (i32, i32) {
    %c0_i32 = arith.constant 0 : i32
    %c0_i32_0 = arith.constant 0 : i32
    %c0_i32_1 = arith.constant 0 : i32
    return %c0_i32, %c0_i32_0 : i32, i32
  }
  func.func @transform_7(%arg0: i32) -> (i32, i32) {
    %c0_i32 = arith.constant 0 : i32
    %c0_i32_0 = arith.constant 0 : i32
    return %c0_i32, %arg0 : i32, i32
  }
}

</mosaic_0001>

<llo_original>
// kernel: tpu_custom_call.1
$region0: #{tpu_custom_call.1}
  #allocation0 [shape = 'u32[]', space=smem, size = 0x4, offset = 0x4, fixed_abs, tag = 'smem constant byte address 0x4 - core index']
  #allocation1 [shape = 'u32[144,128]{1,0:T(1,128)}', space=vmem, size = 0x12000, scoped, tag = 'internal scratch']
  #allocation2 [shape = 'f32[1,1]{1,0:T(1,128)S(1)}', space=vmem, size = 0x200, scoped, tag = 'scoped memory for tpu_custom_call.1']
  %s0 = inlined_call_operand.vmem [shape: f32[512,16], index: 0, kind: input, shape index: {}]
  %s1 = inlined_call_operand.vmem [shape: bf16[128,16], index: 1, kind: input, shape index: {}]
  %s2 = inlined_call_operand.vmem [shape: f32[128,1], index: 2, kind: input, shape index: {}]
  %s3 = inlined_call_operand.vmem [shape: bf16[128,128], index: 3, kind: input, shape index: {}]
  %s4 = inlined_call_operand.vmem [shape: f32[128,1], index: 4, kind: input, shape index: {}]
  %s5 = inlined_call_operand.vmem [shape: f32[128,1], index: 5, kind: input, shape index: {}]
  %s6 = inlined_call_operand.<no memory space> [shape: f32[1,1], index: 6, kind: input, shape index: {}]
  %s7 = inlined_call_operand.hbm [shape: f32[1,512], index: 7, kind: output, shape index: {}]
  %s8 = sld [smem:[#allocation0]]
  $region61: #{tpu_custom_call.1} parent=0
    _
  %s10 = ssub.s32 1, %s8
  %s11 = scalar_select 0, %s10, %s8
  %v12 = vstv %s6
  %13 = vst [vmem:[#allocation2] sm:$0x1] %v12
  $region1: #{tpu_custom_call.1} parent=0
    #allocation3 [shape = 'u8[2048]{0}', space=vmem, size = 0x800, scoped, tag = 'output window, operand 0']
    #allocation4 [shape = 's32[2]{0}', space=sflag, size = 0x8, scoped, tag = 'scoped memory for tpu_custom_call.1']
    %14 = vsyncpa [#allocation4], 0
    %s15 = scalar_lea.sflag [#allocation4], 1
    %16 = vsyncpa %s15, 0
    loop: start=0, step=1, limit=4
    $region2: #{tpu_custom_call.1} parent=1 // loop_pre_header
      _
    $region3: #{tpu_custom_call.1} parent=1 // loop_header
      %s18 = sphi 0, %s22
      %p19 = scmp.ge.s32.totalorder %s18, 4
      %s28 = sphi 0, %s30
      %s31 = sphi 0, %s28
      %s32 = sphi 0, %s31
      %s48 = sphi 0, %s32
      %s52 = sphi 0, %s52
      %s54 = sphi 0, %s52
      %s55 = sphi 0, %s54
      %s69 = sphi 0, %s55
      %s73 = sphi 0, %s73
      %s75 = sphi 0, %s73
      %s76 = sphi 0, %s75
      %s90 = sphi 0, %s76
      %s94 = sphi 0, %s94
      %s96 = sphi 0, %s94
      %s97 = sphi 0, %s96
      %s111 = sphi 0, %s97
      %s115 = sphi 0, %s115
      %s117 = sphi 0, %s115
      %s118 = sphi 0, %s117
      %s132 = sphi 0, %s118
      %s136 = sphi 0, %s136
      %s138 = sphi 0, %s136
      %s139 = sphi 0, %s138
      %s153 = sphi 0, %s139
      %s157 = sphi 0, %s157
      %s159 = sphi 0, %s157
      %s160 = sphi 0, %s159
      %s174 = sphi 0, %s160
      %s180 = sphi 0, %s182
      %s183 = sphi 0, %s180
      %s184 = sphi 0, %s183
      %s200 = sphi 0, %s184
    $region4: #{tpu_custom_call.1} parent=1 // loop_header_branch
      %21 = sbr.rel (%p19) target = $region8
    $region5: #{tpu_custom_call.1} parent=1 // loop_body
      %s23 = ssub.s32 %s18, 1
      %s24 = ssub.s32 %s18, 2
      %s25 = sadd.s32 %s18, 1
      %s26 = ssub.s32 %s18, %s25
      %p27 = scmp.eq.s32.totalorder %s26, 0
      %s29 = sadd.s32 %s28, 1
      %s30 = scalar_select %p27, %s28, %s29
      %p33 = pneg %p27
      %p34 = scmp.eq.s32.totalorder %s18, 1
      %p35 = por %p33, %p34
      %p36 = scmp.ne.s32.totalorder %s28, %s31
      %p37 = scmp.eq.s32.totalorder %s18, 0
      %p38 = por %p36, %p37
      %p39 = scmp.ne.s32.totalorder %s28, %s31
      %p40 = scmp.eq.s32.totalorder %s23, 1
      %p41 = por %p39, %p40
      %p42 = scmp.ne.s32.totalorder %s31, %s32
      %p43 = scmp.eq.s32.totalorder %s23, 0
      %p44 = por %p42, %p43
      %p45 = scmp.ne.s32.totalorder %s31, %s32
      %p46 = scmp.eq.s32.totalorder %s24, 1
      %p47 = por %p45, %p46
      %p49 = scmp.ne.s32.totalorder %s32, %s48
      %p50 = scmp.eq.s32.totalorder %s24, 0
      %p51 = por %p49, %p50
      %s53 = sadd.s32 %s52, 1
      %p56 = scmp.eq.s32.totalorder %s18, 1
      %p57 = scmp.ne.s32.totalorder %s52, %s54
      %p58 = scmp.eq.s32.totalorder %s18, 0
      %p59 = por %p57, %p58
      %p60 = scmp.ne.s32.totalorder %s52, %s54
      %p61 = scmp.eq.s32.totalorder %s23, 1
      %p62 = por %p60, %p61
      %p63 = scmp.ne.s32.totalorder %s54, %s55
      %p64 = scmp.eq.s32.totalorder %s23, 0
      %p65 = por %p63, %p64
      %p66 = scmp.ne.s32.totalorder %s54, %s55
      %p67 = scmp.eq.s32.totalorder %s24, 1
      %p68 = por %p66, %p67
      %p70 = scmp.ne.s32.totalorder %s55, %s69
      %p71 = scmp.eq.s32.totalorder %s24, 0
      %p72 = por %p70, %p71
      %s74 = sadd.s32 %s73, 1
      %p77 = scmp.eq.s32.totalorder %s18, 1
      %p78 = scmp.ne.s32.totalorder %s73, %s75
      %p79 = scmp.eq.s32.totalorder %s18, 0
      %p80 = por %p78, %p79
      %p81 = scmp.ne.s32.totalorder %s73, %s75
      %p82 = scmp.eq.s32.totalorder %s23, 1
      %p83 = por %p81, %p82
      %p84 = scmp.ne.s32.totalorder %s75, %s76
      %p85 = scmp.eq.s32.totalorder %s23, 0
      %p86 = por %p84, %p85
      %p87 = scmp.ne.s32.totalorder %s75, %s76
      %p88 = scmp.eq.s32.totalorder %s24, 1
      %p89 = por %p87, %p88
      %p91 = scmp.ne.s32.totalorder %s76, %s90
      %p92 = scmp.eq.s32.totalorder %s24, 0
      %p93 = por %p91, %p92
      %s95 = sadd.s32 %s94, 1
      %p98 = scmp.eq.s32.totalorder %s18, 1
      %p99 = scmp.ne.s32.totalorder %s94, %s96
      %p100 = scmp.eq.s32.totalorder %s18, 0
      %p101 = por %p99, %p100
      %p102 = scmp.ne.s32.totalorder %s94, %s96
      %p103 = scmp.eq.s32.totalorder %s23, 1
      %p104 = por %p102, %p103
      %p105 = scmp.ne.s32.totalorder %s96, %s97
      %p106 = scmp.eq.s32.totalorder %s23, 0
      %p107 = por %p105, %p106
      %p108 = scmp.ne.s32.totalorder %s96, %s97
      %p109 = scmp.eq.s32.totalorder %s24, 1
      %p110 = por %p108, %p109
      %p112 = scmp.ne.s32.totalorder %s97, %s111
      %p113 = scmp.eq.s32.totalorder %s24, 0
      %p114 = por %p112, %p113
      %s116 = sadd.s32 %s115, 1
      %p119 = scmp.eq.s32.totalorder %s18, 1
      %p120 = scmp.ne.s32.totalorder %s115, %s117
      %p121 = scmp.eq.s32.totalorder %s18, 0
      %p122 = por %p120, %p121
      %p123 = scmp.ne.s32.totalorder %s115, %s117
      %p124 = scmp.eq.s32.totalorder %s23, 1
      %p125 = por %p123, %p124
      %p126 = scmp.ne.s32.totalorder %s117, %s118
      %p127 = scmp.eq.s32.totalorder %s23, 0
      %p128 = por %p126, %p127
      %p129 = scmp.ne.s32.totalorder %s117, %s118
      %p130 = scmp.eq.s32.totalorder %s24, 1
      %p131 = por %p129, %p130
      %p133 = scmp.ne.s32.totalorder %s118, %s132
      %p134 = scmp.eq.s32.totalorder %s24, 0
      %p135 = por %p133, %p134
      %s137 = sadd.s32 %s136, 1
      %p140 = scmp.eq.s32.totalorder %s18, 1
      %p141 = scmp.ne.s32.totalorder %s136, %s138
      %p142 = scmp.eq.s32.totalorder %s18, 0
      %p143 = por %p141, %p142
      %p144 = scmp.ne.s32.totalorder %s136, %s138
      %p145 = scmp.eq.s32.totalorder %s23, 1
      %p146 = por %p144, %p145
      %p147 = scmp.ne.s32.totalorder %s138, %s139
      %p148 = scmp.eq.s32.totalorder %s23, 0
      %p149 = por %p147, %p148
      %p150 = scmp.ne.s32.totalorder %s138, %s139
      %p151 = scmp.eq.s32.totalorder %s24, 1
      %p152 = por %p150, %p151
      %p154 = scmp.ne.s32.totalorder %s139, %s153
      %p155 = scmp.eq.s32.totalorder %s24, 0
      %p156 = por %p154, %p155
      %s158 = sadd.s32 %s157, 1
      %p161 = scmp.eq.s32.totalorder %s18, 1
      %p162 = scmp.ne.s32.totalorder %s157, %s159
      %p163 = scmp.eq.s32.totalorder %s18, 0
      %p164 = por %p162, %p163
      %p165 = scmp.ne.s32.totalorder %s157, %s159
      %p166 = scmp.eq.s32.totalorder %s23, 1
      %p167 = por %p165, %p166
      %p168 = scmp.ne.s32.totalorder %s159, %s160
      %p169 = scmp.eq.s32.totalorder %s23, 0
      %p170 = por %p168, %p169
      %p171 = scmp.ne.s32.totalorder %s159, %s160
      %p172 = scmp.eq.s32.totalorder %s24, 1
      %p173 = por %p171, %p172
      %p175 = scmp.ne.s32.totalorder %s160, %s174
      %p176 = scmp.eq.s32.totalorder %s24, 0
      %p177 = por %p175, %p176
      %s178 = ssub.s32 %s18, %s25
      %p179 = scmp.eq.s32.totalorder %s178, 0
      %s181 = sadd.s32 %s180, 1
      %s182 = scalar_select %p179, %s180, %s181
      %p185 = pneg %p179
      %p186 = scmp.eq.s32.totalorder %s18, 1
      %p187 = por %p185, %p186
      %p188 = scmp.ne.s32.totalorder %s180, %s183
      %p189 = scmp.eq.s32.totalorder %s18, 0
      %p190 = por %p188, %p189
      %p191 = scmp.ne.s32.totalorder %s180, %s183
      %p192 = scmp.eq.s32.totalorder %s23, 1
      %p193 = por %p191, %p192
      %p194 = scmp.ne.s32.totalorder %s183, %s184
      %p195 = scmp.eq.s32.totalorder %s23, 0
      %p196 = por %p194, %p195
      %p197 = scmp.ne.s32.totalorder %s183, %s184
      %p198 = scmp.eq.s32.totalorder %s24, 1
      %p199 = por %p197, %p198
      %p201 = scmp.ne.s32.totalorder %s184, %s200
      %p202 = scmp.eq.s32.totalorder %s24, 0
      %p203 = por %p201, %p202
      %p204 = scmp.le.s32.totalorder 1, %s18
      %p205 = scmp.lt.s32.totalorder %s18, 3
      %p206 = pnand %p204, %p205
      %p207 = pneg %p206
      // Predicated region
      $region9: #{tpu_custom_call.1} parent=5 // pred_check
        _
      $region10: #{tpu_custom_call.1} parent=5 // pred_check_branch
        %209 = sbr.rel (%p206) target = $region12
      $region11: #{tpu_custom_call.1} parent=5 // pred_region
        %s210 = ssub.s32 %s18, 1
        // Predicated region
        $region13: #{tpu_custom_call.1} parent=11 // pred_check
          %p211 = pneg %p65
        $region14: #{tpu_custom_call.1} parent=11 // pred_check_branch
          %213 = sbr.rel (%p211) target = $region16
        $region15: #{tpu_custom_call.1} parent=11 // pred_region
          _
        $region16: #{tpu_custom_call.1} parent=11 // pred_fallthru
          _
        // Predicated region
        $region17: #{tpu_custom_call.1} parent=11 // pred_check
          %p214 = pneg %p86
        $region18: #{tpu_custom_call.1} parent=11 // pred_check_branch
          %216 = sbr.rel (%p214) target = $region20
        $region19: #{tpu_custom_call.1} parent=11 // pred_region
          _
        $region20: #{tpu_custom_call.1} parent=11 // pred_fallthru
          _
        // Predicated region
        $region21: #{tpu_custom_call.1} parent=11 // pred_check
          %p217 = pneg %p107
        $region22: #{tpu_custom_call.1} parent=11 // pred_check_branch
          %219 = sbr.rel (%p217) target = $region24
        $region23: #{tpu_custom_call.1} parent=11 // pred_region
          _
        $region24: #{tpu_custom_call.1} parent=11 // pred_fallthru
          _
        // Predicated region
        $region25: #{tpu_custom_call.1} parent=11 // pred_check
          %p220 = pneg %p128
        $region26: #{tpu_custom_call.1} parent=11 // pred_check_branch
          %222 = sbr.rel (%p220) target = $region28
        $region27: #{tpu_custom_call.1} parent=11 // pred_region
          _
        $region28: #{tpu_custom_call.1} parent=11 // pred_fallthru
          _
        // Predicated region
        $region29: #{tpu_custom_call.1} parent=11 // pred_check
          %p223 = pneg %p149
        $region30: #{tpu_custom_call.1} parent=11 // pred_check_branch
          %225 = sbr.rel (%p223) target = $region32
        $region31: #{tpu_custom_call.1} parent=11 // pred_region
          _
        $region32: #{tpu_custom_call.1} parent=11 // pred_fallthru
          _
        // Predicated region
        $region33: #{tpu_custom_call.1} parent=11 // pred_check
          %p226 = pneg %p170
        $region34: #{tpu_custom_call.1} parent=11 // pred_check_branch
          %228 = sbr.rel (%p226) target = $region36
        $region35: #{tpu_custom_call.1} parent=11 // pred_region
          _
        $region36: #{tpu_custom_call.1} parent=11 // pred_fallthru
          _
      $region12: #{tpu_custom_call.1} parent=5 // pred_fallthru
        _
      %p229 = scmp.lt.s32.totalorder %s18, 2
      // Predicated region
      $region37: #{tpu_custom_call.1} parent=5 // pred_check
        %p230 = pneg %p229
      $region38: #{tpu_custom_call.1} parent=5 // pred_check_branch
        %232 = sbr.rel (%p230) target = $region40
      $region39: #{tpu_custom_call.1} parent=5 // pred_region
        // Predicated region
        $region41: #{tpu_custom_call.1} parent=39 // pred_check
          %p233 = pneg %p38
        $region42: #{tpu_custom_call.1} parent=39 // pred_check_branch
          %235 = sbr.rel (%p233) target = $region44
        $region43: #{tpu_custom_call.1} parent=39 // pred_region
          %s236 = smul.u32 32, %s18
          %p237 = scmp.lt.s32.totalorder %s236, 63
          %s238 = scalar_select %p237, %s236, 63
          %s239 = smul.addr %s238, 8
          %s240 = scalar_lea.vmem %s0, %s239
          %s241 = smul.u32 32, %s18
        $region44: #{tpu_custom_call.1} parent=39 // pred_fallthru
          _
      $region40: #{tpu_custom_call.1} parent=5 // pred_fallthru
        _
      %p242 = scmp.le.s32.totalorder 1, %s18
      %p243 = scmp.lt.s32.totalorder %s18, 3
      %p244 = pnand %p242, %p243
      %p245 = pneg %p244
      // Predicated region
      $region45: #{tpu_custom_call.1} parent=5 // pred_check
        _
      $region46: #{tpu_custom_call.1} parent=5 // pred_check_branch
        %247 = sbr.rel (%p244) target = $region48
      $region47: #{tpu_custom_call.1} parent=5 // pred_region
        %s248 = ssub.s32 %s18, 1
        %s249 = smul.u32 32, %s23
        %p250 = scmp.lt.s32.totalorder %s249, 63
        %s251 = scalar_select %p250, %s249, 63
        %s252 = smul.addr %s251, 8
        %s253 = scalar_lea.vmem %s0, %s252
        %p254 = pneg %p44
        %p255 = pneg %p41
        %p256 = pneg %p65
        %p257 = pneg %p62
        %p258 = pneg %p86
        %p259 = pneg %p83
        %p260 = pneg %p107
        %p261 = pneg %p104
        %p262 = pneg %p128
        %p263 = pneg %p125
        %p264 = pneg %p149
        %p265 = pneg %p146
        %p266 = pneg %p170
        %p267 = pneg %p167
        %p268 = pneg %p196
        %p269 = pneg %p193
        %s270 = sand.u32 %s183, 1
        %s271 = scalar_lea.sflag [#allocation4], %s270
        %s272 = sand.u32 %s183, 1
        %s273 = smul.addr %s272, 2
        %s274 = scalar_lea.vmem [#allocation3], %s273
        %s275 = smul.u32 32, %s23
        %p276 = scmp.lt.s32.totalorder %s275, 63
        %s277 = scalar_select %p276, %s275, 63
        %s278 = smul.addr %s277, 8
        %s279 = scalar_lea.vmem %s0, %s278
        %s280 = smul.u32 32, %s23
        %s281 = smul.u32 2, %s23
        %v283 = vld [vmem:[%s1] sm:$0xf]
        %v284 = vld [vmem:[%s1 + $0x4] sm:$0xf]
        %v285 = vld [vmem:[%s1 + $0x8] sm:$0xf]
        %v286 = vld [vmem:[%s1 + $0xc] sm:$0xf]
        %v287 = vld [vmem:[%s1 + $0x10] sm:$0xf]
        %v288 = vld [vmem:[%s1 + $0x14] sm:$0xf]
        %v289 = vld [vmem:[%s1 + $0x18] sm:$0xf]
        %v290 = vld [vmem:[%s1 + $0x1c] sm:$0xf]
        %v291 = vld [vmem:[%s1 + $0x20] sm:$0xf]
        %v292 = vld [vmem:[%s1 + $0x24] sm:$0xf]
        %v293 = vld [vmem:[%s1 + $0x28] sm:$0xf]
        %v294 = vld [vmem:[%s1 + $0x2c] sm:$0xf]
        %v295 = vld [vmem:[%s1 + $0x30] sm:$0xf]
        %v296 = vld [vmem:[%s1 + $0x34] sm:$0xf]
        %v297 = vld [vmem:[%s1 + $0x38] sm:$0xf]
        %v298 = vld [vmem:[%s1 + $0x3c] sm:$0xf]
        %v299 = vld [vmem:[%s2] sm:$0xff]
        %v300 = vld [vmem:[%s2 + $0x8] sm:$0xff]
        %v301 = vld [vmem:[%s2 + $0x10] sm:$0xff]
        %v302 = vld [vmem:[%s2 + $0x18] sm:$0xff]
        %v303 = vld [vmem:[%s2 + $0x20] sm:$0xff]
        %v304 = vld [vmem:[%s2 + $0x28] sm:$0xff]
        %v305 = vld [vmem:[%s2 + $0x30] sm:$0xff]
        %v306 = vld [vmem:[%s2 + $0x38] sm:$0xff]
        %v307 = vld [vmem:[%s2 + $0x40] sm:$0xff]
        %v308 = vld [vmem:[%s2 + $0x48] sm:$0xff]
        %v309 = vld [vmem:[%s2 + $0x50] sm:$0xff]
        %v310 = vld [vmem:[%s2 + $0x58] sm:$0xff]
        %v311 = vld [vmem:[%s2 + $0x60] sm:$0xff]
        %v312 = vld [vmem:[%s2 + $0x68] sm:$0xff]
        %v313 = vld [vmem:[%s2 + $0x70] sm:$0xff]
        %v314 = vld [vmem:[%s2 + $0x78] sm:$0xff]
        %v315 = vld [vmem:[%s279] sm:$0xff]
        %v316 = vld [vmem:[%s279 + $0x8] sm:$0xff]
        %v317 = vld [vmem:[%s279 + $0x10] sm:$0xff]
        %v318 = vld [vmem:[%s279 + $0x18] sm:$0xff]
        %v319 = vld [vmem:[%s279 + $0x20] sm:$0xff]
        %v320 = vld [vmem:[%s279 + $0x28] sm:$0xff]
        %v321 = vld [vmem:[%s279 + $0x30] sm:$0xff]
        %v322 = vld [vmem:[%s279 + $0x38] sm:$0xff]
        %v323 = vld [vmem:[%s279 + $0x40] sm:$0xff]
        %v324 = vld [vmem:[%s279 + $0x48] sm:$0xff]
        %v325 = vld [vmem:[%s279 + $0x50] sm:$0xff]
        %v326 = vld [vmem:[%s279 + $0x58] sm:$0xff]
        %v327 = vld [vmem:[%s279 + $0x60] sm:$0xff]
        %v328 = vld [vmem:[%s279 + $0x68] sm:$0xff]
        %v329 = vld [vmem:[%s279 + $0x70] sm:$0xff]
        %v330 = vld [vmem:[%s279 + $0x78] sm:$0xff]
        %v331 = vld [vmem:[%s279 + $0x80] sm:$0xff]
        %v332 = vld [vmem:[%s279 + $0x88] sm:$0xff]
        %v333 = vld [vmem:[%s279 + $0x90] sm:$0xff]
        %v334 = vld [vmem:[%s279 + $0x98] sm:$0xff]
        %v335 = vld [vmem:[%s279 + $0xa0] sm:$0xff]
        %v336 = vld [vmem:[%s279 + $0xa8] sm:$0xff]
        %v337 = vld [vmem:[%s279 + $0xb0] sm:$0xff]
        %v338 = vld [vmem:[%s279 + $0xb8] sm:$0xff]
        %v339 = vld [vmem:[%s279 + $0xc0] sm:$0xff]
        %v340 = vld [vmem:[%s279 + $0xc8] sm:$0xff]
        %v341 = vld [vmem:[%s279 + $0xd0] sm:$0xff]
        %v342 = vld [vmem:[%s279 + $0xd8] sm:$0xff]
        %v343 = vld [vmem:[%s279 + $0xe0] sm:$0xff]
        %v344 = vld [vmem:[%s279 + $0xe8] sm:$0xff]
        %v345 = vld [vmem:[%s279 + $0xf0] sm:$0xff]
        %v346 = vld [vmem:[%s279 + $0xf8] sm:$0xff]
        %v347 = vpack.c.bf16 %v316, %v315
        %v348 = vpack.c.bf16 %v318, %v317
        %v349 = vpack.c.bf16 %v320, %v319
        %v350 = vpack.c.bf16 %v322, %v321
        %v351 = vpack.c.bf16 %v324, %v323
        %v352 = vpack.c.bf16 %v326, %v325
        %v353 = vpack.c.bf16 %v328, %v327
        %v354 = vpack.c.bf16 %v330, %v329
        %v355 = vpack.c.bf16 %v332, %v331
        %v356 = vpack.c.bf16 %v334, %v333
        %v357 = vpack.c.bf16 %v336, %v335
        %v358 = vpack.c.bf16 %v338, %v337
        %v359 = vpack.c.bf16 %v340, %v339
        %v360 = vpack.c.bf16 %v342, %v341
        %v361 = vpack.c.bf16 %v344, %v343
        %v362 = vpack.c.bf16 %v346, %v345
        %364 = vset.pattern.permute.xlu0 0
        %365 = vperm.xlu0 %364, %v299
        %v366 = vpop.permute.xlu0 %365
        %369 = vset.pattern.permute.xlu0 0
        %370 = vperm.xlu0 %369, %v300
        %v371 = vpop.permute.xlu0 %370
        %374 = vset.pattern.permute.xlu0 0
        %375 = vperm.xlu0 %374, %v301
        %v376 = vpop.permute.xlu0 %375
        %379 = vset.pattern.permute.xlu0 0
        %380 = vperm.xlu0 %379, %v302
        %v381 = vpop.permute.xlu0 %380
        %384 = vset.pattern.permute.xlu0 0
        %385 = vperm.xlu0 %384, %v303
        %v386 = vpop.permute.xlu0 %385
        %389 = vset.pattern.permute.xlu0 0
        %390 = vperm.xlu0 %389, %v304
        %v391 = vpop.permute.xlu0 %390
        %394 = vset.pattern.permute.xlu0 0
        %395 = vperm.xlu0 %394, %v305
        %v396 = vpop.permute.xlu0 %395
        %399 = vset.pattern.permute.xlu0 0
        %400 = vperm.xlu0 %399, %v306
        %v401 = vpop.permute.xlu0 %400
        %404 = vset.pattern.permute.xlu0 0
        %405 = vperm.xlu0 %404, %v307
        %v406 = vpop.permute.xlu0 %405
        %409 = vset.pattern.permute.xlu0 0
        %410 = vperm.xlu0 %409, %v308
        %v411 = vpop.permute.xlu0 %410
        %414 = vset.pattern.permute.xlu0 0
        %415 = vperm.xlu0 %414, %v309
        %v416 = vpop.permute.xlu0 %415
        %419 = vset.pattern.permute.xlu0 0
        %420 = vperm.xlu0 %419, %v310
        %v421 = vpop.permute.xlu0 %420
        %424 = vset.pattern.permute.xlu0 0
        %425 = vperm.xlu0 %424, %v311
        %v426 = vpop.permute.xlu0 %425
        %429 = vset.pattern.permute.xlu0 0
        %430 = vperm.xlu0 %429, %v312
        %v431 = vpop.permute.xlu0 %430
        %434 = vset.pattern.permute.xlu0 0
        %435 = vperm.xlu0 %434, %v313
        %v436 = vpop.permute.xlu0 %435
        %439 = vset.pattern.permute.xlu0 0
        %440 = vperm.xlu0 %439, %v314
        %v441 = vpop.permute.xlu0 %440
        %v459 = vunpack.c.l.b16 %v283
        %v460 = vunpack.c.l.b16 %v284
        %v461 = vunpack.c.l.b16 %v285
        %v462 = vunpack.c.l.b16 %v286
        %v463 = vunpack.c.l.b16 %v287
        %v464 = vunpack.c.l.b16 %v288
        %v465 = vunpack.c.l.b16 %v289
        %v466 = vunpack.c.l.b16 %v290
        %v467 = vunpack.c.l.b16 %v291
        %v468 = vunpack.c.l.b16 %v292
        %v469 = vunpack.c.l.b16 %v293
        %v470 = vunpack.c.l.b16 %v294
        %v471 = vunpack.c.l.b16 %v295
        %v472 = vunpack.c.l.b16 %v296
        %v473 = vunpack.c.l.b16 %v297
        %v474 = vunpack.c.l.b16 %v298
        %v475 = vpack.c.b16 %v460, %v459
        %v476 = vpack.c.b16 %v462, %v461
        %v477 = vpack.c.b16 %v464, %v463
        %v478 = vpack.c.b16 %v466, %v465
        %v479 = vpack.c.b16 %v468, %v467
        %v480 = vpack.c.b16 %v470, %v469
        %v481 = vpack.c.b16 %v472, %v471
        %v482 = vpack.c.b16 %v474, %v473
        %vm483 = vcmask 130048
        %v485 = vsel %vm483, %v475, 0
        %v488 = vsel %vm483, %v476, 0
        %v491 = vsel %vm483, %v477, 0
        %v494 = vsel %vm483, %v478, 0
        %v497 = vsel %vm483, %v479, 0
        %v500 = vsel %vm483, %v480, 0
        %v503 = vsel %vm483, %v481, 0
        %v506 = vsel %vm483, %v482, 0
        %v509 = vsel %vm483, %v347, 0
        %v512 = vsel %vm483, %v348, 0
        %v515 = vsel %vm483, %v349, 0
        %v518 = vsel %vm483, %v350, 0
        %v521 = vsel %vm483, %v351, 0
        %v524 = vsel %vm483, %v352, 0
        %v527 = vsel %vm483, %v353, 0
        %v530 = vsel %vm483, %v354, 0
        %v533 = vsel %vm483, %v355, 0
        %v536 = vsel %vm483, %v356, 0
        %v539 = vsel %vm483, %v357, 0
        %v542 = vsel %vm483, %v358, 0
        %v545 = vsel %vm483, %v359, 0
        %v548 = vsel %vm483, %v360, 0
        %v551 = vsel %vm483, %v361, 0
        %v554 = vsel %vm483, %v362, 0
        %556 = vmatprep.subr.bf16.mxu0 0
        %557 = vmatpush1.bf16.xpose.msra.mxu0 %v530
        %558 = vmatprep.subr.bf16.mxu0 0
        %559 = vmatpush1.bf16.xpose.msra.mxu0 %v527
        %560 = vmatprep.subr.bf16.mxu0 0
        %561 = vmatpush1.bf16.xpose.msra.mxu0 %v524
        %562 = vmatprep.subr.bf16.mxu0 0
        %563 = vmatpush1.bf16.xpose.msra.mxu0 %v521
        %564 = vmatprep.subr.bf16.mxu0 0
        %565 = vmatpush1.bf16.xpose.msra.mxu0 %v518
        %566 = vmatprep.subr.bf16.mxu0 0
        %567 = vmatpush1.bf16.xpose.msra.mxu0 %v515
        %568 = vmatprep.subr.bf16.mxu0 0
        %569 = vmatpush1.bf16.xpose.msra.mxu0 %v512
        %570 = vmatprep.subr.bf16.mxu0 0
        %571 = vmatpush1.bf16.xpose.msra.mxu0 %v509
        %572 = vmatprep.subr.bf16.mxu0 0
        %573 = vmatpush2.bf16.xpose.msra.mxu0 %v554
        %574 = vmatprep.subr.bf16.mxu0 0
        %575 = vmatpush2.bf16.xpose.msra.mxu0 %v551
        %576 = vmatprep.subr.bf16.mxu0 0
        %577 = vmatpush2.bf16.xpose.msra.mxu0 %v548
        %578 = vmatprep.subr.bf16.mxu0 0
        %579 = vmatpush2.bf16.xpose.msra.mxu0 %v545
        %580 = vmatprep.subr.bf16.mxu0 0
        %581 = vmatpush2.bf16.xpose.msra.mxu0 %v542
        %582 = vmatprep.subr.bf16.mxu0 0
        %583 = vmatpush2.bf16.xpose.msra.mxu0 %v539
        %584 = vmatprep.subr.bf16.mxu0 0
        %585 = vmatpush2.bf16.xpose.msra.mxu0 %v536
        %586 = vmatprep.subr.bf16.mxu0 0
        %587 = vmatpush2.bf16.xpose.msra.mxu0 %v533
        %588 = vmatprep.mubr.bf16.mxu0 0
        %589 = vmatmul.mubr.bf16.gmra.mxu0 %v485
        %v590 = vpop.f32.mrf.mxu0
        %v591 = vadd.f32 %v366, %v590
        %v592 = vpop.f32.mrf.mxu0
        %v593 = vadd.f32 %v366, %v592
        %v594 = vpop.f32.mrf.mxu0
        %v595 = vadd.f32 %v371, %v594
        %v596 = vpop.f32.mrf.mxu0
        %v597 = vadd.f32 %v371, %v596
        %598 = vmatprep.mubr.bf16.mxu0 0
        %599 = vmatmul.mubr.bf16.gmra.mxu0 %v488
        %v600 = vpop.f32.mrf.mxu0
        %v601 = vadd.f32 %v376, %v600
        %v602 = vpop.f32.mrf.mxu0
        %v603 = vadd.f32 %v376, %v602
        %v604 = vpop.f32.mrf.mxu0
        %v605 = vadd.f32 %v381, %v604
        %v606 = vpop.f32.mrf.mxu0
        %v607 = vadd.f32 %v381, %v606
        %608 = vmatprep.mubr.bf16.mxu0 0
        %609 = vmatmul.mubr.bf16.gmra.mxu0 %v491
        %v610 = vpop.f32.mrf.mxu0
        %v611 = vadd.f32 %v386, %v610
        %v612 = vpop.f32.mrf.mxu0
        %v613 = vadd.f32 %v386, %v612
        %v614 = vpop.f32.mrf.mxu0
        %v615 = vadd.f32 %v391, %v614
        %v616 = vpop.f32.mrf.mxu0
        %v617 = vadd.f32 %v391, %v616
        %618 = vmatprep.mubr.bf16.mxu0 0
        %619 = vmatmul.mubr.bf16.gmra.mxu0 %v494
        %v620 = vpop.f32.mrf.mxu0
        %v621 = vadd.f32 %v396, %v620
        %v622 = vpop.f32.mrf.mxu0
        %v623 = vadd.f32 %v396, %v622
        %v624 = vpop.f32.mrf.mxu0
        %v625 = vadd.f32 %v401, %v624
        %v626 = vpop.f32.mrf.mxu0
        %v627 = vadd.f32 %v401, %v626
        %628 = vmatprep.mubr.bf16.mxu0 0
        %629 = vmatmul.mubr.bf16.gmra.mxu0 %v497
        %v630 = vpop.f32.mrf.mxu0
        %v631 = vadd.f32 %v406, %v630
        %v632 = vpop.f32.mrf.mxu0
        %v633 = vadd.f32 %v406, %v632
        %v634 = vpop.f32.mrf.mxu0
        %v635 = vadd.f32 %v411, %v634
        %v636 = vpop.f32.mrf.mxu0
        %v637 = vadd.f32 %v411, %v636
        %638 = vmatprep.mubr.bf16.mxu0 0
        %639 = vmatmul.mubr.bf16.gmra.mxu0 %v500
        %v640 = vpop.f32.mrf.mxu0
        %v641 = vadd.f32 %v416, %v640
        %v642 = vpop.f32.mrf.mxu0
        %v643 = vadd.f32 %v416, %v642
        %v644 = vpop.f32.mrf.mxu0
        %v645 = vadd.f32 %v421, %v644
        %v646 = vpop.f32.mrf.mxu0
        %v647 = vadd.f32 %v421, %v646
        %648 = vmatprep.mubr.bf16.mxu0 0
        %649 = vmatmul.mubr.bf16.gmra.mxu0 %v503
        %v650 = vpop.f32.mrf.mxu0
        %v651 = vadd.f32 %v426, %v650
        %v652 = vpop.f32.mrf.mxu0
        %v653 = vadd.f32 %v426, %v652
        %v654 = vpop.f32.mrf.mxu0
        %v655 = vadd.f32 %v431, %v654
        %v656 = vpop.f32.mrf.mxu0
        %v657 = vadd.f32 %v431, %v656
        %658 = vmatprep.mubr.bf16.mxu0 0
        %659 = vmatmul.mubr.bf16.gmra.mxu0 %v506
        %v660 = vpop.f32.mrf.mxu0
        %v661 = vadd.f32 %v436, %v660
        %v662 = vpop.f32.mrf.mxu0
        %v663 = vadd.f32 %v436, %v662
        %v664 = vpop.f32.mrf.mxu0
        %v665 = vadd.f32 %v441, %v664
        %v666 = vpop.f32.mrf.mxu0
        %v667 = vadd.f32 %v441, %v666
        %668 = vdwg.mxu0
        %v669 = vmax.f32 %v591, 0.0
        %v670 = vmax.f32 %v593, 0.0
        %v671 = vmax.f32 %v595, 0.0
        %v672 = vmax.f32 %v597, 0.0
        %v673 = vmax.f32 %v601, 0.0
        %v674 = vmax.f32 %v603, 0.0
        %v675 = vmax.f32 %v605, 0.0
        %v676 = vmax.f32 %v607, 0.0
        %v677 = vmax.f32 %v611, 0.0
        %v678 = vmax.f32 %v613, 0.0
        %v679 = vmax.f32 %v615, 0.0
        %v680 = vmax.f32 %v617, 0.0
        %v681 = vmax.f32 %v621, 0.0
        %v682 = vmax.f32 %v623, 0.0
        %v683 = vmax.f32 %v625, 0.0
        %v684 = vmax.f32 %v627, 0.0
        %v685 = vmax.f32 %v631, 0.0
        %v686 = vmax.f32 %v633, 0.0
        %v687 = vmax.f32 %v635, 0.0
        %v688 = vmax.f32 %v637, 0.0
        %v689 = vmax.f32 %v641, 0.0
        %v690 = vmax.f32 %v643, 0.0
        %v691 = vmax.f32 %v645, 0.0
        %v692 = vmax.f32 %v647, 0.0
        %v693 = vmax.f32 %v651, 0.0
        %v694 = vmax.f32 %v653, 0.0
        %v695 = vmax.f32 %v655, 0.0
        %v696 = vmax.f32 %v657, 0.0
        %v697 = vmax.f32 %v661, 0.0
        %v698 = vmax.f32 %v663, 0.0
        %v699 = vmax.f32 %v665, 0.0
        %v700 = vmax.f32 %v667, 0.0
        %v701 = vpack.c.bf16 %v671, %v669
        %v702 = vpack.c.bf16 %v672, %v670
        %v703 = vpack.c.bf16 %v675, %v673
        %v704 = vpack.c.bf16 %v676, %v674
        %v705 = vpack.c.bf16 %v679, %v677
        %v706 = vpack.c.bf16 %v680, %v678
        %v707 = vpack.c.bf16 %v683, %v681
        %v708 = vpack.c.bf16 %v684, %v682
        %v709 = vpack.c.bf16 %v687, %v685
        %v710 = vpack.c.bf16 %v688, %v686
        %v711 = vpack.c.bf16 %v691, %v689
        %v712 = vpack.c.bf16 %v692, %v690
        %v713 = vpack.c.bf16 %v695, %v693
        %v714 = vpack.c.bf16 %v696, %v694
        %v715 = vpack.c.bf16 %v699, %v697
        %v716 = vpack.c.bf16 %v700, %v698
        %v717 = vld [vmem:[%s3] sm:$0xf]
        %v718 = vld [vmem:[%s3 + $0x4] sm:$0xf]
        %v719 = vld [vmem:[%s3 + $0x8] sm:$0xf]
        %v720 = vld [vmem:[%s3 + $0xc] sm:$0xf]
        %v721 = vld [vmem:[%s3 + $0x10] sm:$0xf]
        %v722 = vld [vmem:[%s3 + $0x14] sm:$0xf]
        %v723 = vld [vmem:[%s3 + $0x18] sm:$0xf]
        %v724 = vld [vmem:[%s3 + $0x1c] sm:$0xf]
        %v725 = vld [vmem:[%s3 + $0x20] sm:$0xf]
        %v726 = vld [vmem:[%s3 + $0x24] sm:$0xf]
        %v727 = vld [vmem:[%s3 + $0x28] sm:$0xf]
        %v728 = vld [vmem:[%s3 + $0x2c] sm:$0xf]
        %v729 = vld [vmem:[%s3 + $0x30] sm:$0xf]
        %v730 = vld [vmem:[%s3 + $0x34] sm:$0xf]
        %v731 = vld [vmem:[%s3 + $0x38] sm:$0xf]
        %v732 = vld [vmem:[%s3 + $0x3c] sm:$0xf]
        %v733 = vld [vmem:[%s4] sm:$0xff]
        %v734 = vld [vmem:[%s4 + $0x8] sm:$0xff]
        %v735 = vld [vmem:[%s4 + $0x10] sm:$0xff]
        %v736 = vld [vmem:[%s4 + $0x18] sm:$0xff]
        %v737 = vld [vmem:[%s4 + $0x20] sm:$0xff]
        %v738 = vld [vmem:[%s4 + $0x28] sm:$0xff]
        %v739 = vld [vmem:[%s4 + $0x30] sm:$0xff]
        %v740 = vld [vmem:[%s4 + $0x38] sm:$0xff]
        %v741 = vld [vmem:[%s4 + $0x40] sm:$0xff]
        %v742 = vld [vmem:[%s4 + $0x48] sm:$0xff]
        %v743 = vld [vmem:[%s4 + $0x50] sm:$0xff]
        %v744 = vld [vmem:[%s4 + $0x58] sm:$0xff]
        %v745 = vld [vmem:[%s4 + $0x60] sm:$0xff]
        %v746 = vld [vmem:[%s4 + $0x68] sm:$0xff]
        %v747 = vld [vmem:[%s4 + $0x70] sm:$0xff]
        %v748 = vld [vmem:[%s4 + $0x78] sm:$0xff]
        %750 = vset.pattern.permute.xlu0 0
        %751 = vperm.xlu0 %750, %v733
        %v752 = vpop.permute.xlu0 %751
        %755 = vset.pattern.permute.xlu0 0
        %756 = vperm.xlu0 %755, %v734
        %v757 = vpop.permute.xlu0 %756
        %760 = vset.pattern.permute.xlu0 0
        %761 = vperm.xlu0 %760, %v735
        %v762 = vpop.permute.xlu0 %761
        %765 = vset.pattern.permute.xlu0 0
        %766 = vperm.xlu0 %765, %v736
        %v767 = vpop.permute.xlu0 %766
        %770 = vset.pattern.permute.xlu0 0
        %771 = vperm.xlu0 %770, %v737
        %v772 = vpop.permute.xlu0 %771
        %775 = vset.pattern.permute.xlu0 0
        %776 = vperm.xlu0 %775, %v738
        %v777 = vpop.permute.xlu0 %776
        %780 = vset.pattern.permute.xlu0 0
        %781 = vperm.xlu0 %780, %v739
        %v782 = vpop.permute.xlu0 %781
        %785 = vset.pattern.permute.xlu0 0
        %786 = vperm.xlu0 %785, %v740
        %v787 = vpop.permute.xlu0 %786
        %790 = vset.pattern.permute.xlu0 0
        %791 = vperm.xlu0 %790, %v741
        %v792 = vpop.permute.xlu0 %791
        %795 = vset.pattern.permute.xlu0 0
        %796 = vperm.xlu0 %795, %v742
        %v797 = vpop.permute.xlu0 %796
        %800 = vset.pattern.permute.xlu0 0
        %801 = vperm.xlu0 %800, %v743
        %v802 = vpop.permute.xlu0 %801
        %805 = vset.pattern.permute.xlu0 0
        %806 = vperm.xlu0 %805, %v744
        %v807 = vpop.permute.xlu0 %806
        %810 = vset.pattern.permute.xlu0 0
        %811 = vperm.xlu0 %810, %v745
        %v812 = vpop.permute.xlu0 %811
        %815 = vset.pattern.permute.xlu0 0
        %816 = vperm.xlu0 %815, %v746
        %v817 = vpop.permute.xlu0 %816
        %820 = vset.pattern.permute.xlu0 0
        %821 = vperm.xlu0 %820, %v747
        %v822 = vpop.permute.xlu0 %821
        %825 = vset.pattern.permute.xlu0 0
        %826 = vperm.xlu0 %825, %v748
        %v827 = vpop.permute.xlu0 %826
        %v845 = vunpack.c.l.b16 %v717
        %v846 = vunpack.c.l.b16 %v718
        %v847 = vunpack.c.l.b16 %v719
        %v848 = vunpack.c.l.b16 %v720
        %v849 = vunpack.c.l.b16 %v721
        %v850 = vunpack.c.l.b16 %v722
        %v851 = vunpack.c.l.b16 %v723
        %v852 = vunpack.c.l.b16 %v724
        %v853 = vunpack.c.l.b16 %v725
        %v854 = vunpack.c.l.b16 %v726
        %v855 = vunpack.c.l.b16 %v727
        %v856 = vunpack.c.l.b16 %v728
        %v857 = vunpack.c.l.b16 %v729
        %v858 = vunpack.c.l.b16 %v730
        %v859 = vunpack.c.l.b16 %v731
        %v860 = vunpack.c.l.b16 %v732
        %v861 = vpack.c.b16 %v846, %v845
        %v862 = vpack.c.b16 %v848, %v847
        %v863 = vpack.c.b16 %v850, %v849
        %v864 = vpack.c.b16 %v852, %v851
        %v865 = vpack.c.b16 %v854, %v853
        %v866 = vpack.c.b16 %v856, %v855
        %v867 = vpack.c.b16 %v858, %v857
        %v868 = vpack.c.b16 %v860, %v859
        %877 = vmatprep.subr.bf16.mxu0 %v716
        %878 = vmatpush1.bf16.msra.mxu0 %v715
        %879 = vmatprep.subr.bf16.mxu0 %v714
        %880 = vmatpush1.bf16.msra.mxu0 %v713
        %881 = vmatprep.subr.bf16.mxu0 %v712
        %882 = vmatpush1.bf16.msra.mxu0 %v711
        %883 = vmatprep.subr.bf16.mxu0 %v710
        %884 = vmatpush1.bf16.msra.mxu0 %v709
        %885 = vmatprep.subr.bf16.mxu0 %v708
        %886 = vmatpush1.bf16.msra.mxu0 %v707
        %887 = vmatprep.subr.bf16.mxu0 %v706
        %888 = vmatpush1.bf16.msra.mxu0 %v705
        %889 = vmatprep.subr.bf16.mxu0 %v704
        %890 = vmatpush1.bf16.msra.mxu0 %v703
        %891 = vmatprep.subr.bf16.mxu0 %v702
        %892 = vmatpush1.bf16.msra.mxu0 %v701
        %893 = vmatprep.subr.bf16.mxu0 0
        %894 = vmatpush2.bf16.msra.mxu0 0
        %895 = vmatprep.subr.bf16.mxu0 0
        %896 = vmatpush2.bf16.msra.mxu0 0
        %897 = vmatprep.subr.bf16.mxu0 0
        %898 = vmatpush2.bf16.msra.mxu0 0
        %899 = vmatprep.subr.bf16.mxu0 0
        %900 = vmatpush2.bf16.msra.mxu0 0
        %901 = vmatprep.subr.bf16.mxu0 0
        %902 = vmatpush2.bf16.msra.mxu0 0
        %903 = vmatprep.subr.bf16.mxu0 0
        %904 = vmatpush2.bf16.msra.mxu0 0
        %905 = vmatprep.subr.bf16.mxu0 0
        %906 = vmatpush2.bf16.msra.mxu0 0
        %907 = vmatprep.subr.bf16.mxu0 0
        %908 = vmatpush2.bf16.msra.mxu0 0
        %909 = vmatprep.mubr.bf16.mxu0 0
        %910 = vmatmul.mubr.bf16.gmra.mxu0 %v861
        %v911 = vpop.f32.mrf.mxu0
        %v912 = vadd.f32 %v752, %v911
        %v913 = vpop.f32.mrf.mxu0
        %v914 = vadd.f32 %v752, %v913
        %v915 = vpop.f32.mrf.mxu0
        %v916 = vadd.f32 %v757, %v915
        %v917 = vpop.f32.mrf.mxu0
        %v918 = vadd.f32 %v757, %v917
        %919 = vmatprep.mubr.bf16.mxu0 0
        %920 = vmatmul.mubr.bf16.gmra.mxu0 %v862
        %v921 = vpop.f32.mrf.mxu0
        %v922 = vadd.f32 %v762, %v921
        %v923 = vpop.f32.mrf.mxu0
        %v924 = vadd.f32 %v762, %v923
        %v925 = vpop.f32.mrf.mxu0
        %v926 = vadd.f32 %v767, %v925
        %v927 = vpop.f32.mrf.mxu0
        %v928 = vadd.f32 %v767, %v927
        %929 = vmatprep.mubr.bf16.mxu0 0
        %930 = vmatmul.mubr.bf16.gmra.mxu0 %v863
        %v931 = vpop.f32.mrf.mxu0
        %v932 = vadd.f32 %v772, %v931
        %v933 = vpop.f32.mrf.mxu0
        %v934 = vadd.f32 %v772, %v933
        %v935 = vpop.f32.mrf.mxu0
        %v936 = vadd.f32 %v777, %v935
        %v937 = vpop.f32.mrf.mxu0
        %v938 = vadd.f32 %v777, %v937
        %939 = vmatprep.mubr.bf16.mxu0 0
        %940 = vmatmul.mubr.bf16.gmra.mxu0 %v864
        %v941 = vpop.f32.mrf.mxu0
        %v942 = vadd.f32 %v782, %v941
        %v943 = vpop.f32.mrf.mxu0
        %v944 = vadd.f32 %v782, %v943
        %v945 = vpop.f32.mrf.mxu0
        %v946 = vadd.f32 %v787, %v945
        %v947 = vpop.f32.mrf.mxu0
        %v948 = vadd.f32 %v787, %v947
        %949 = vmatprep.mubr.bf16.mxu0 0
        %950 = vmatmul.mubr.bf16.gmra.mxu0 %v865
        %v951 = vpop.f32.mrf.mxu0
        %v952 = vadd.f32 %v792, %v951
        %v953 = vpop.f32.mrf.mxu0
        %v954 = vadd.f32 %v792, %v953
        %v955 = vpop.f32.mrf.mxu0
        %v956 = vadd.f32 %v797, %v955
        %v957 = vpop.f32.mrf.mxu0
        %v958 = vadd.f32 %v797, %v957
        %959 = vmatprep.mubr.bf16.mxu0 0
        %960 = vmatmul.mubr.bf16.gmra.mxu0 %v866
        %v961 = vpop.f32.mrf.mxu0
        %v962 = vadd.f32 %v802, %v961
        %v963 = vpop.f32.mrf.mxu0
        %v964 = vadd.f32 %v802, %v963
        %v965 = vpop.f32.mrf.mxu0
        %v966 = vadd.f32 %v807, %v965
        %v967 = vpop.f32.mrf.mxu0
        %v968 = vadd.f32 %v807, %v967
        %969 = vmatprep.mubr.bf16.mxu0 0
        %970 = vmatmul.mubr.bf16.gmra.mxu0 %v867
        %v971 = vpop.f32.mrf.mxu0
        %v972 = vadd.f32 %v812, %v971
        %v973 = vpop.f32.mrf.mxu0
        %v974 = vadd.f32 %v812, %v973
        %v975 = vpop.f32.mrf.mxu0
        %v976 = vadd.f32 %v817, %v975
        %v977 = vpop.f32.mrf.mxu0
        %v978 = vadd.f32 %v817, %v977
        %979 = vmatprep.mubr.bf16.mxu0 0
        %980 = vmatmul.mubr.bf16.gmra.mxu0 %v868
        %v981 = vpop.f32.mrf.mxu0
        %v982 = vadd.f32 %v822, %v981
        %v983 = vpop.f32.mrf.mxu0
        %v984 = vadd.f32 %v822, %v983
        %v985 = vpop.f32.mrf.mxu0
        %v986 = vadd.f32 %v827, %v985
        %v987 = vpop.f32.mrf.mxu0
        %v988 = vadd.f32 %v827, %v987
        %989 = vdwg.mxu0
        %v990 = vmax.f32 %v912, 0.0
        %v991 = vmax.f32 %v914, 0.0
        %v992 = vmax.f32 %v916, 0.0
        %v993 = vmax.f32 %v918, 0.0
        %v994 = vmax.f32 %v922, 0.0
        %v995 = vmax.f32 %v924, 0.0
        %v996 = vmax.f32 %v926, 0.0
        %v997 = vmax.f32 %v928, 0.0
        %v998 = vmax.f32 %v932, 0.0
        %v999 = vmax.f32 %v934, 0.0
        %v1000 = vmax.f32 %v936, 0.0
        %v1001 = vmax.f32 %v938, 0.0
        %v1002 = vmax.f32 %v942, 0.0
        %v1003 = vmax.f32 %v944, 0.0
        %v1004 = vmax.f32 %v946, 0.0
        %v1005 = vmax.f32 %v948, 0.0
        %v1006 = vmax.f32 %v952, 0.0
        %v1007 = vmax.f32 %v954, 0.0
        %v1008 = vmax.f32 %v956, 0.0
        %v1009 = vmax.f32 %v958, 0.0
        %v1010 = vmax.f32 %v962, 0.0
        %v1011 = vmax.f32 %v964, 0.0
        %v1012 = vmax.f32 %v966, 0.0
        %v1013 = vmax.f32 %v968, 0.0
        %v1014 = vmax.f32 %v972, 0.0
        %v1015 = vmax.f32 %v974, 0.0
        %v1016 = vmax.f32 %v976, 0.0
        %v1017 = vmax.f32 %v978, 0.0
        %v1018 = vmax.f32 %v982, 0.0
        %v1019 = vmax.f32 %v984, 0.0
        %v1020 = vmax.f32 %v986, 0.0
        %v1021 = vmax.f32 %v988, 0.0
        %v1022 = vld [vmem:[%s5] sm:$0xff]
        %v1023 = vld [vmem:[%s5 + $0x8] sm:$0xff]
        %v1024 = vld [vmem:[%s5 + $0x10] sm:$0xff]
        %v1025 = vld [vmem:[%s5 + $0x18] sm:$0xff]
        %v1026 = vld [vmem:[%s5 + $0x20] sm:$0xff]
        %v1027 = vld [vmem:[%s5 + $0x28] sm:$0xff]
        %v1028 = vld [vmem:[%s5 + $0x30] sm:$0xff]
        %v1029 = vld [vmem:[%s5 + $0x38] sm:$0xff]
        %v1030 = vld [vmem:[%s5 + $0x40] sm:$0xff]
        %v1031 = vld [vmem:[%s5 + $0x48] sm:$0xff]
        %v1032 = vld [vmem:[%s5 + $0x50] sm:$0xff]
        %v1033 = vld [vmem:[%s5 + $0x58] sm:$0xff]
        %v1034 = vld [vmem:[%s5 + $0x60] sm:$0xff]
        %v1035 = vld [vmem:[%s5 + $0x68] sm:$0xff]
        %v1036 = vld [vmem:[%s5 + $0x70] sm:$0xff]
        %v1037 = vld [vmem:[%s5 + $0x78] sm:$0xff]
        %v1038 = vld [vmem:[#allocation2] sm:$0x1]
        %1040 = vset.pattern.permute.xlu0 0
        %1041 = vperm.xlu0 %1040, %v1022
        %v1042 = vpop.permute.xlu0 %1041
        %1045 = vset.pattern.permute.xlu0 0
        %1046 = vperm.xlu0 %1045, %v1023
        %v1047 = vpop.permute.xlu0 %1046
        %1050 = vset.pattern.permute.xlu0 0
        %1051 = vperm.xlu0 %1050, %v1024
        %v1052 = vpop.permute.xlu0 %1051
        %1055 = vset.pattern.permute.xlu0 0
        %1056 = vperm.xlu0 %1055, %v1025
        %v1057 = vpop.permute.xlu0 %1056
        %1060 = vset.pattern.permute.xlu0 0
        %1061 = vperm.xlu0 %1060, %v1026
        %v1062 = vpop.permute.xlu0 %1061
        %1065 = vset.pattern.permute.xlu0 0
        %1066 = vperm.xlu0 %1065, %v1027
        %v1067 = vpop.permute.xlu0 %1066
        %1070 = vset.pattern.permute.xlu0 0
        %1071 = vperm.xlu0 %1070, %v1028
        %v1072 = vpop.permute.xlu0 %1071
        %1075 = vset.pattern.permute.xlu0 0
        %1076 = vperm.xlu0 %1075, %v1029
        %v1077 = vpop.permute.xlu0 %1076
        %1080 = vset.pattern.permute.xlu0 0
        %1081 = vperm.xlu0 %1080, %v1030
        %v1082 = vpop.permute.xlu0 %1081
        %1085 = vset.pattern.permute.xlu0 0
        %1086 = vperm.xlu0 %1085, %v1031
        %v1087 = vpop.permute.xlu0 %1086
        %1090 = vset.pattern.permute.xlu0 0
        %1091 = vperm.xlu0 %1090, %v1032
        %v1092 = vpop.permute.xlu0 %1091
        %1095 = vset.pattern.permute.xlu0 0
        %1096 = vperm.xlu0 %1095, %v1033
        %v1097 = vpop.permute.xlu0 %1096
        %1100 = vset.pattern.permute.xlu0 0
        %1101 = vperm.xlu0 %1100, %v1034
        %v1102 = vpop.permute.xlu0 %1101
        %1105 = vset.pattern.permute.xlu0 0
        %1106 = vperm.xlu0 %1105, %v1035
        %v1107 = vpop.permute.xlu0 %1106
        %1110 = vset.pattern.permute.xlu0 0
        %1111 = vperm.xlu0 %1110, %v1036
        %v1112 = vpop.permute.xlu0 %1111
        %1115 = vset.pattern.permute.xlu0 0
        %1116 = vperm.xlu0 %1115, %v1037
        %v1117 = vpop.permute.xlu0 %1116
        %v1119 = vmul.f32 %v990, %v1042
        %v1120 = vmul.f32 %v991, %v1042
        %v1121 = vmul.f32 %v992, %v1047
        %v1122 = vmul.f32 %v993, %v1047
        %v1123 = vmul.f32 %v994, %v1052
        %v1124 = vmul.f32 %v995, %v1052
        %v1125 = vmul.f32 %v996, %v1057
        %v1126 = vmul.f32 %v997, %v1057
        %v1127 = vmul.f32 %v998, %v1062
        %v1128 = vmul.f32 %v999, %v1062
        %v1129 = vmul.f32 %v1000, %v1067
        %v1130 = vmul.f32 %v1001, %v1067
        %v1131 = vmul.f32 %v1002, %v1072
        %v1132 = vmul.f32 %v1003, %v1072
        %v1133 = vmul.f32 %v1004, %v1077
        %v1134 = vmul.f32 %v1005, %v1077
        %v1135 = vmul.f32 %v1006, %v1082
        %v1136 = vmul.f32 %v1007, %v1082
        %v1137 = vmul.f32 %v1008, %v1087
        %v1138 = vmul.f32 %v1009, %v1087
        %v1139 = vmul.f32 %v1010, %v1092
        %v1140 = vmul.f32 %v1011, %v1092
        %v1141 = vmul.f32 %v1012, %v1097
        %v1142 = vmul.f32 %v1013, %v1097
        %v1143 = vmul.f32 %v1014, %v1102
        %v1144 = vmul.f32 %v1015, %v1102
        %v1145 = vmul.f32 %v1016, %v1107
        %v1146 = vmul.f32 %v1017, %v1107
        %v1147 = vmul.f32 %v1018, %v1112
        %v1148 = vmul.f32 %v1019, %v1112
        %v1149 = vmul.f32 %v1020, %v1117
        %v1150 = vmul.f32 %v1021, %v1117
        %v1151 = vadd.f32 %v1119, %v1121
        %v1152 = vadd.f32 %v1151, %v1123
        %v1153 = vadd.f32 %v1152, %v1125
        %v1154 = vadd.f32 %v1153, %v1127
        %v1155 = vadd.f32 %v1154, %v1129
        %v1156 = vadd.f32 %v1155, %v1131
        %v1157 = vadd.f32 %v1156, %v1133
        %v1158 = vadd.f32 %v1157, %v1135
        %v1159 = vadd.f32 %v1158, %v1137
        %v1160 = vadd.f32 %v1159, %v1139
        %v1161 = vadd.f32 %v1160, %v1141
        %v1162 = vadd.f32 %v1161, %v1143
        %v1163 = vadd.f32 %v1162, %v1145
        %v1164 = vadd.f32 %v1163, %v1147
        %v1165 = vadd.f32 %v1164, %v1149
        %v1166 = vrot.slane %v1165, 4
        %v1167 = vadd.f32 %v1165, %v1166
        %v1168 = vrot.slane %v1167, 2
        %v1169 = vadd.f32 %v1167, %v1168
        %v1170 = vrot.slane %v1169, 1
        %v1171 = vadd.f32 %v1169, %v1170
        %v1172 = vadd.f32 %v1120, %v1122
        %v1173 = vadd.f32 %v1172, %v1124
        %v1174 = vadd.f32 %v1173, %v1126
        %v1175 = vadd.f32 %v1174, %v1128
        %v1176 = vadd.f32 %v1175, %v1130
        %v1177 = vadd.f32 %v1176, %v1132
        %v1178 = vadd.f32 %v1177, %v1134
        %v1179 = vadd.f32 %v1178, %v1136
        %v1180 = vadd.f32 %v1179, %v1138
        %v1181 = vadd.f32 %v1180, %v1140
        %v1182 = vadd.f32 %v1181, %v1142
        %v1183 = vadd.f32 %v1182, %v1144
        %v1184 = vadd.f32 %v1183, %v1146
        %v1185 = vadd.f32 %v1184, %v1148
        %v1186 = vadd.f32 %v1185, %v1150
        %v1187 = vrot.slane %v1186, 4
        %v1188 = vadd.f32 %v1186, %v1187
        %v1189 = vrot.slane %v1188, 2
        %v1190 = vadd.f32 %v1188, %v1189
        %v1191 = vrot.slane %v1190, 1
        %v1192 = vadd.f32 %v1190, %v1191
        %1194 = vset.pattern.permute.xlu0 0
        %1195 = vperm.xlu0 %1194, %v1038
        %v1196 = vpop.permute.xlu0 %1195
        %v1198 = vlaneseq
        %v1199 = vshrl.u32 %v1198, 7
        %v1200 = vsub.s32 0, %v1199
        %v1201 = vrot.slane %v1196, %v1200
        %v1202 = vadd.f32 %v1171, %v1201
        %v1203 = vadd.f32 %v1192, %v1201
        %v1206 = vcombine.low %v1202, %v1203
        %v1208 = vunpack.c.l.s4 1966171168
        %v1209 = vunpack.c.0.s8 %v1208
        %v1210 = vlaneseq
        %v1211 = vshrl.u32 %v1210, 7
        %v1212 = vsub.s32 %v1209, %v1211
        %v1213 = vrot.slane %v1206, %v1212
        %v1215 = vunpack.c.l.s4 1966171168
        %v1216 = vunpack.c.0.s8 %v1215
        %v1217 = vlaneseq
        %v1218 = vshrl.u32 %v1217, 7
        %v1219 = vsub.s32 %v1216, %v1218
        %v1220 = vrot.slane %v1213, %v1219
        %v1222 = vlaneseq
        %vm1223 = vcmp.ge.s32.totalorder %v1222, 0
        %vm1224 = vcmp.lt.s32.totalorder %v1222, 256
        %vm1225 = vmand %vm1223, %vm1224
        %1226 = vst.msk [vmem:[%s274] sm:$0x3] %vm1225, %v1220
        %s1227 = sand.u32 %s183, 1
        %s1228 = scalar_lea.sflag [#allocation4], %s1227
        %s1229 = sand.u32 %s183, 1
        %s1230 = smul.addr %s1229, 2
        %s1231 = scalar_lea.vmem [#allocation3], %s1230
        // Predicated region
        $region49: #{tpu_custom_call.1} parent=47 // pred_check
          %p1232 = pneg %p193
        $region50: #{tpu_custom_call.1} parent=47 // pred_check_branch
          %1234 = sbr.rel (%p1232) target = $region52
        $region51: #{tpu_custom_call.1} parent=47 // pred_region
          %s1235 = smul.u32 2, %s23
          %s1237 = ssub.s32 32, 32
          %1238 = vsyncadd %s1228, %s1237
          %s1239 = smul.addr %s1235, 16
          %s1240 = scalar_lea.hbm %s7, %s1239
          %s1242 = sshll.u32 %s1231, 4
          %s1243 = int_to_ptr.vmem [resolvable:$true] %s1242
          %1245 = dma.vmem_to_hbm [thread:$0]  %s1243, 32, %s1240, %s1228
        $region52: #{tpu_custom_call.1} parent=47 // pred_fallthru
          _
      $region48: #{tpu_custom_call.1} parent=5 // pred_fallthru
        _
      %p1246 = scmp.le.s32.totalorder 2, %s18
      // Predicated region
      $region53: #{tpu_custom_call.1} parent=5 // pred_check
        %p1247 = pneg %p1246
      $region54: #{tpu_custom_call.1} parent=5 // pred_check_branch
        %1249 = sbr.rel (%p1247) target = $region56
      $region55: #{tpu_custom_call.1} parent=5 // pred_region
        %s1250 = ssub.s32 %s18, 2
        // Predicated region
        $region57: #{tpu_custom_call.1} parent=55 // pred_check
          %p1251 = pneg %p199
        $region58: #{tpu_custom_call.1} parent=55 // pred_check_branch
          %1253 = sbr.rel (%p1251) target = $region60
        $region59: #{tpu_custom_call.1} parent=55 // pred_region
          %s1254 = sand.u32 %s184, 1
          %s1255 = scalar_lea.sflag [#allocation4], %s1254
          %s1256 = sand.u32 %s184, 1
          %s1257 = smul.addr %s1256, 2
          %s1258 = scalar_lea.vmem [#allocation3], %s1257
          %1259 = dma.done %s1255, 32
        $region60: #{tpu_custom_call.1} parent=55 // pred_fallthru
          _
      $region56: #{tpu_custom_call.1} parent=5 // pred_fallthru
        _
    $region6: #{tpu_custom_call.1} parent=1 // loop_footer
      %s22 = sadd.s32 1, %s18
    $region7: #{tpu_custom_call.1} parent=1 // loop_footer_branch
      %17 = sbr.rel target = $region3
    $region8: #{tpu_custom_call.1} parent=1 // loop_exit
      _
    %1260 = vsyncpa [#allocation4], 1
    %s1261 = scalar_lea.sflag [#allocation4], 1
    %1262 = vsyncpa %s1261, 1

</llo_original>
